<compile_context>
chip_gen: v7x
topology: tpu7x:2x2x1
jax: 0.10.0
libtpu: 0.0.40
codegen_flags: <defaults>
</compile_context>

<pallas_src>
import jax
import jax.numpy as jnp
from jax.experimental import pallas as pl
from jax.experimental.pallas import tpu as pltpu

EPS = 1e-5


def _make_kernel(B, C, H, W):
    HW = H * W
    N = B * HW
    inv_n = 1.0 / float(N)
    pow2 = (H & (H - 1)) == 0 and (W & (W - 1)) == 0
    w_shift = (W - 1).bit_length() if pow2 else 0      # log2(W) when W is 2^k

    def kernel(x_ref, w_ref, bn_ref, out_ref):
        # ---- boundary masks from an in-kernel iota (no index inputs) -------
        pix = jax.lax.broadcasted_iota(jnp.int32, (C, N), 1)   # flat pixel id
        if pow2:
            w_idx = pix & (W - 1)
            h_idx = (pix >> w_shift) & (H - 1)
        else:
            # TODO(synk): non-power-of-two H/W fall back to vector int div/mod.
            w_idx = pix % W
            h_idx = (pix // W) % H
        row_top = h_idx == 0
        row_bot = h_idx == H - 1
        col_lft = w_idx == 0
        col_rgt = w_idx == W - 1

        # ---- assemble (C, N) channel-major activation (lane-aligned) -------
        x = jnp.concatenate([x_ref[b] for b in range(B)], axis=-1)

        def im2col(act):
            # 3x3 ReflectionPad2d(1) neighborhood via XLU rolls + boundary
            # selects.  Rolls wrap only at lanes that the reflection selects
            # replace, so circular shifts are safe.
            cols = {0: act}
            for dw in (-1, 1):
                fwd = pltpu.roll(act, shift=(-dw) % N, axis=1)   # act[i + dw]
                bwd = pltpu.roll(act, shift=dw % N, axis=1)      # act[i - dw]
                bad = col_rgt if dw == 1 else col_lft
                cols[dw] = jnp.where(bad, bwd, fwd)
            taps = {}
            for dw in (-1, 0, 1):
                cd = cols[dw]
                nxt = pltpu.roll(cd, shift=(-W) % N, axis=1)     # cd[i + W]
                prv = pltpu.roll(cd, shift=W % N, axis=1)        # cd[i - W]
                taps[(-1, dw)] = jnp.where(row_top, nxt, prv)
                taps[(0, dw)] = cd
                taps[(1, dw)] = jnp.where(row_bot, prv, nxt)
            # (9*C, N) patch matrix, tap-major (matches weight prepack).
            return jnp.concatenate(
                [taps[(dh, dw)] for dh in (-1, 0, 1) for dw in (-1, 0, 1)],
                axis=0)

        def conv_bn(act, w, gamma, beta):
            # One im2col MXU matmul; conv bias omitted (cancelled by BN mean).
            y = jnp.dot(w, im2col(act), preferred_element_type=jnp.float32)
            # Fused single-pass training-mode BatchNorm (biased statistics).
            s = jnp.sum(y, axis=1, keepdims=True)
            ss = jnp.sum(y * y, axis=1, keepdims=True)
            mean = s * inv_n
            var = jnp.maximum(ss * inv_n - mean * mean, 0.0)   # clamp cancellation
            scale = gamma * jax.lax.rsqrt(var + EPS)
            shift = beta - mean * scale
            return y * scale + shift

        h = jnp.maximum(conv_bn(x, w_ref[0], bn_ref[:, 0:1], bn_ref[:, 1:2]), 0.0)
        # TODO(synk): use_dropout=False configuration; nn.Dropout(0.5) branch
        # not emitted.
        z = conv_bn(h, w_ref[1], bn_ref[:, 2:3], bn_ref[:, 3:4])
        res = x + z                                             # residual add

        # ---- write back as (B, C, HW) blocks (lane-dense, aligned) ---------
        for b in range(B):
            out_ref[b] = res[:, b * HW:(b + 1) * HW]

    return kernel


def resnet_block_forward(x_nchw, params):
    """x_nchw: (B, C, H, W) float32 (PyTorch layout).  Returns NCHW output."""
    w1, b1, g1, be1, w2, b2, g2, be2 = params
    del b1, b2  # exactly cancelled by training-mode BatchNorm mean subtraction
    B, C, H, W = x_nchw.shape
    HW = H * W
    N = B * HW

    x_flat = x_nchw.reshape(B, C, HW).astype(jnp.float32)   # free reshape

    def stack_w(w):  # torch OIHW (C_out, C_in, 3, 3) -> (C_out, 9*C_in), tap-major
        return jnp.transpose(w, (0, 2, 3, 1)).reshape(C, 9 * C).astype(jnp.float32)

    wstack = jnp.stack([stack_w(w1), stack_w(w2)], axis=0)              # (2, C, 9C)
    bnpack = jnp.stack([g1, be1, g2, be2], axis=1).astype(jnp.float32)  # (C, 4)

    vmem = lambda: pl.BlockSpec(memory_space=pltpu.MemorySpace.VMEM)
    cost = pl.CostEstimate(
        flops=2 * 2 * C * (9 * C) * N,
        transcendentals=2 * C,
        bytes_accessed=4 * (2 * B * C * HW + 2 * C * 9 * C + C * 4),
    )
    out_flat = pl.pallas_call(
        _make_kernel(B, C, H, W),
        out_shape=jax.ShapeDtypeStruct((B, C, HW), jnp.float32),
        in_specs=[vmem(), vmem(), vmem()],
        out_specs=vmem(),
        cost_estimate=cost,
    )(x_flat, wstack, bnpack)
    return out_flat.reshape(B, C, H, W)


def ref_forward(x_nchw, params):
    """Pure-JAX reference (faithful to the PyTorch module, incl. conv bias)."""
    w1, b1, g1, be1, w2, b2, g2, be2 = params
    x = jnp.transpose(x_nchw, (0, 2, 3, 1)).astype(jnp.float32)

    def conv(h, w, b):
        hp = jnp.pad(h, ((0, 0), (1, 1), (1, 1), (0, 0)), mode='reflect')
        w_hwio = jnp.transpose(w, (2, 3, 1, 0))
        y = jax.lax.conv_general_dilated(
            hp, w_hwio, (1, 1), 'VALID',
            dimension_numbers=('NHWC', 'HWIO', 'NHWC'))
        return y + b.reshape(1, 1, 1, -1)

    def bn(y, g, be):
        m = jnp.mean(y, axis=(0, 1, 2), keepdims=True)
        v = jnp.mean((y - m) ** 2, axis=(0, 1, 2), keepdims=True)
        return ((y - m) * jax.lax.rsqrt(v + EPS) * g.reshape(1, 1, 1, -1)
                + be.reshape(1, 1, 1, -1))

    h = jnp.maximum(bn(conv(x, w1, b1), g1, be1), 0.0)
    z = bn(conv(h, w2, b2), g2, be2)
    return jnp.transpose(x + z, (0, 3, 1, 2))


if __name__ == "__main__":
    B, C, H, W = 2, 4, 16, 16   # dim = 4
    key = jax.random.PRNGKey(0)
    ks = jax.random.split(key, 9)

    x = jax.random.normal(ks[0], (B, C, H, W), jnp.float32)
    # Deterministic synthetic parameters (torch Conv2d weight layout OIHW).
    w1 = jax.random.normal(ks[1], (C, C, 3, 3), jnp.float32) * 0.2
    b1 = jax.random.normal(ks[2], (C,), jnp.float32) * 0.1
    g1 = 1.0 + 0.1 * jax.random.normal(ks[3], (C,), jnp.float32)
    be1 = 0.1 * jax.random.normal(ks[4], (C,), jnp.float32)
    w2 = jax.random.normal(ks[5], (C, C, 3, 3), jnp.float32) * 0.2
    b2 = jax.random.normal(ks[6], (C,), jnp.float32) * 0.1
    g2 = 1.0 + 0.1 * jax.random.normal(ks[7], (C,), jnp.float32)
    be2 = 0.1 * jax.random.normal(ks[8], (C,), jnp.float32)
    params = (w1, b1, g1, be1, w2, b2, g2, be2)

    out = resnet_block_forward(x, params)
    jax.block_until_ready(out)

    ref = ref_forward(x, params)
    assert out.shape == (B, C, H, W)
    assert jnp.allclose(out, ref, atol=5e-4, rtol=5e-4), \
        float(jnp.max(jnp.abs(out - ref)))
    print("KERNEL_OK")
</pallas_src>

<mosaic_0001>
module attributes {stable_mosaic.version = 11 : i64} {
  func.func @kernel(%arg0: memref<2x4x256xf32, #tpu.memory_space<vmem>>, %arg1: memref<2x4x36xf32, #tpu.memory_space<vmem>>, %arg2: memref<4x4xf32, #tpu.memory_space<vmem>>, %arg3: memref<2x4x256xf32, #tpu.memory_space<vmem>>) attributes {dimension_semantics = [], scalar_prefetch = 0 : i64, scratch_operands = 0 : i64, tpu.core_type = #tpu.core_type<tc>} {
    %0 = tpu.iota {dimensions = array<i32: 1>} : vector<4x512xi32>
    %c15_i32 = arith.constant 15 : i32
    %1 = vector.broadcast %c15_i32 : i32 to vector<4x512xi32>
    %2 = arith.andi %0, %1 : vector<4x512xi32>
    %c4_i32 = arith.constant 4 : i32
    %3 = vector.broadcast %c4_i32 : i32 to vector<4x512xi32>
    %4 = arith.shrsi %0, %3 : vector<4x512xi32>
    %c15_i32_0 = arith.constant 15 : i32
    %5 = vector.broadcast %c15_i32_0 : i32 to vector<4x512xi32>
    %6 = arith.andi %4, %5 : vector<4x512xi32>
    %c0_i32 = arith.constant 0 : i32
    %7 = vector.broadcast %c0_i32 : i32 to vector<4x512xi32>
    %8 = arith.cmpi eq, %6, %7 : vector<4x512xi32>
    %c15_i32_1 = arith.constant 15 : i32
    %9 = vector.broadcast %c15_i32_1 : i32 to vector<4x512xi32>
    %10 = arith.cmpi eq, %6, %9 : vector<4x512xi32>
    %c0_i32_2 = arith.constant 0 : i32
    %11 = vector.broadcast %c0_i32_2 : i32 to vector<4x512xi32>
    %12 = arith.cmpi eq, %2, %11 : vector<4x512xi32>
    %c15_i32_3 = arith.constant 15 : i32
    %13 = vector.broadcast %c15_i32_3 : i32 to vector<4x512xi32>
    %14 = arith.cmpi eq, %2, %13 : vector<4x512xi32>
    %c0 = arith.constant 0 : index
    %c0_4 = arith.constant 0 : index
    %c0_5 = arith.constant 0 : index
    %15 = vector.load %arg0[%c0, %c0_4, %c0_5] : memref<2x4x256xf32, #tpu.memory_space<vmem>>, vector<1x4x256xf32>
    %16 = vector.shape_cast %15 : vector<1x4x256xf32> to vector<4x256xf32>
    %c1 = arith.constant 1 : index
    %c0_6 = arith.constant 0 : index
    %c0_7 = arith.constant 0 : index
    %17 = vector.load %arg0[%c1, %c0_6, %c0_7] : memref<2x4x256xf32, #tpu.memory_space<vmem>>, vector<1x4x256xf32>
    %18 = vector.shape_cast %17 : vector<1x4x256xf32> to vector<4x256xf32>
    %19 = tpu.concatenate %16, %18 in 1 : vector<4x256xf32>, vector<4x256xf32> -> vector<4x512xf32>
    %c0_8 = arith.constant 0 : index
    %c0_9 = arith.constant 0 : index
    %c0_10 = arith.constant 0 : index
    %20 = vector.load %arg1[%c0_8, %c0_9, %c0_10] : memref<2x4x36xf32, #tpu.memory_space<vmem>>, vector<1x4x36xf32>
    %21 = vector.shape_cast %20 : vector<1x4x36xf32> to vector<4x36xf32>
    %c0_11 = arith.constant 0 : index
    %c0_12 = arith.constant 0 : index
    %22 = vector.load %arg2[%c0_11, %c0_12] : memref<4x4xf32, #tpu.memory_space<vmem>>, vector<4x1xf32>
    %c0_13 = arith.constant 0 : index
    %c1_14 = arith.constant 1 : index
    %23 = vector.load %arg2[%c0_13, %c1_14] : memref<4x4xf32, #tpu.memory_space<vmem>>, vector<4x1xf32>
    %c1_i32 = arith.constant 1 : i32
    %24 = tpu.dynamic_rotate %19 by %c1_i32 dim 1 : vector<4x512xf32>, i32 -> vector<4x512xf32>
    %c511_i32 = arith.constant 511 : i32
    %25 = tpu.dynamic_rotate %19 by %c511_i32 dim 1 : vector<4x512xf32>, i32 -> vector<4x512xf32>
    %26 = arith.select %12, %25, %24 : vector<4x512xi1>, vector<4x512xf32>
    %c511_i32_15 = arith.constant 511 : i32
    %27 = tpu.dynamic_rotate %19 by %c511_i32_15 dim 1 : vector<4x512xf32>, i32 -> vector<4x512xf32>
    %c1_i32_16 = arith.constant 1 : i32
    %28 = tpu.dynamic_rotate %19 by %c1_i32_16 dim 1 : vector<4x512xf32>, i32 -> vector<4x512xf32>
    %29 = arith.select %14, %28, %27 : vector<4x512xi1>, vector<4x512xf32>
    %c496_i32 = arith.constant 496 : i32
    %30 = tpu.dynamic_rotate %26 by %c496_i32 dim 1 : vector<4x512xf32>, i32 -> vector<4x512xf32>
    %c16_i32 = arith.constant 16 : i32
    %31 = tpu.dynamic_rotate %26 by %c16_i32 dim 1 : vector<4x512xf32>, i32 -> vector<4x512xf32>
    %32 = arith.select %8, %30, %31 : vector<4x512xi1>, vector<4x512xf32>
    %33 = arith.select %10, %31, %30 : vector<4x512xi1>, vector<4x512xf32>
    %c496_i32_17 = arith.constant 496 : i32
    %34 = tpu.dynamic_rotate %19 by %c496_i32_17 dim 1 : vector<4x512xf32>, i32 -> vector<4x512xf32>
    %c16_i32_18 = arith.constant 16 : i32
    %35 = tpu.dynamic_rotate %19 by %c16_i32_18 dim 1 : vector<4x512xf32>, i32 -> vector<4x512xf32>
    %36 = arith.select %8, %34, %35 : vector<4x512xi1>, vector<4x512xf32>
    %37 = arith.select %10, %35, %34 : vector<4x512xi1>, vector<4x512xf32>
    %c496_i32_19 = arith.constant 496 : i32
    %38 = tpu.dynamic_rotate %29 by %c496_i32_19 dim 1 : vector<4x512xf32>, i32 -> vector<4x512xf32>
    %c16_i32_20 = arith.constant 16 : i32
    %39 = tpu.dynamic_rotate %29 by %c16_i32_20 dim 1 : vector<4x512xf32>, i32 -> vector<4x512xf32>
    %40 = arith.select %8, %38, %39 : vector<4x512xi1>, vector<4x512xf32>
    %41 = arith.select %10, %39, %38 : vector<4x512xi1>, vector<4x512xf32>
    %42 = tpu.concatenate %32, %36, %40, %26, %19, %29, %33, %37, %41 in 0 : vector<4x512xf32>, vector<4x512xf32>, vector<4x512xf32>, vector<4x512xf32>, vector<4x512xf32>, vector<4x512xf32>, vector<4x512xf32>, vector<4x512xf32>, vector<4x512xf32> -> vector<36x512xf32>
    %cst = arith.constant dense<0.000000e+00> : vector<4x512xf32>
    %43 = tpu.matmul %21, %42, %cst {dimension_numbers = #tpu.dot_dimension_numbers<[1], [0], [0], [1], [0, 0, 1, 1], [], []>} : vector<4x36xf32>, vector<36x512xf32>, vector<4x512xf32> -> vector<4x512xf32>
    %cst_21 = arith.constant dense<0.000000e+00> : vector<4xf32>
    %44 = vector.multi_reduction <add>, %43, %cst_21 [1] : vector<4x512xf32> to vector<4xf32>
    %45 = vector.shape_cast %44 : vector<4xf32> to vector<4x1xf32>
    %46 = arith.mulf %43, %43 : vector<4x512xf32>
    %cst_22 = arith.constant dense<0.000000e+00> : vector<4xf32>
    %47 = vector.multi_reduction <add>, %46, %cst_22 [1] : vector<4x512xf32> to vector<4xf32>
    %48 = vector.shape_cast %47 : vector<4xf32> to vector<4x1xf32>
    %cst_23 = arith.constant 0.001953125 : f32
    %49 = vector.broadcast %cst_23 : f32 to vector<4x1xf32>
    %50 = arith.mulf %45, %49 : vector<4x1xf32>
    %cst_24 = arith.constant 0.001953125 : f32
    %51 = vector.broadcast %cst_24 : f32 to vector<4x1xf32>
    %52 = arith.mulf %48, %51 : vector<4x1xf32>
    %53 = arith.mulf %50, %50 : vector<4x1xf32>
    %54 = arith.subf %52, %53 : vector<4x1xf32>
    %cst_25 = arith.constant 0.000000e+00 : f32
    %55 = vector.broadcast %cst_25 : f32 to vector<4x1xf32>
    %56 = arith.maximumf %54, %55 : vector<4x1xf32>
    %cst_26 = arith.constant 9.99999974E-6 : f32
    %57 = vector.broadcast %cst_26 : f32 to vector<4x1xf32>
    %58 = arith.addf %56, %57 : vector<4x1xf32>
    %59 = math.rsqrt %58 : vector<4x1xf32>
    %60 = arith.mulf %22, %59 : vector<4x1xf32>
    %61 = arith.mulf %50, %60 : vector<4x1xf32>
    %62 = arith.subf %23, %61 : vector<4x1xf32>
    %63 = vector.broadcast %60 : vector<4x1xf32> to vector<4x512xf32>
    %64 = arith.mulf %43, %63 : vector<4x512xf32>
    %65 = vector.broadcast %62 : vector<4x1xf32> to vector<4x512xf32>
    %66 = arith.addf %64, %65 : vector<4x512xf32>
    %cst_27 = arith.constant 0.000000e+00 : f32
    %67 = vector.broadcast %cst_27 : f32 to vector<4x512xf32>
    %68 = arith.maximumf %66, %67 : vector<4x512xf32>
    %c1_28 = arith.constant 1 : index
    %c0_29 = arith.constant 0 : index
    %c0_30 = arith.constant 0 : index
    %69 = vector.load %arg1[%c1_28, %c0_29, %c0_30] : memref<2x4x36xf32, #tpu.memory_space<vmem>>, vector<1x4x36xf32>
    %70 = vector.shape_cast %69 : vector<1x4x36xf32> to vector<4x36xf32>
    %c0_31 = arith.constant 0 : index
    %c2 = arith.constant 2 : index
    %71 = vector.load %arg2[%c0_31, %c2] : memref<4x4xf32, #tpu.memory_space<vmem>>, vector<4x1xf32>
    %c0_32 = arith.constant 0 : index
    %c3 = arith.constant 3 : index
    %72 = vector.load %arg2[%c0_32, %c3] : memref<4x4xf32, #tpu.memory_space<vmem>>, vector<4x1xf32>
    %c1_i32_33 = arith.constant 1 : i32
    %73 = tpu.dynamic_rotate %68 by %c1_i32_33 dim 1 : vector<4x512xf32>, i32 -> vector<4x512xf32>
    %c511_i32_34 = arith.constant 511 : i32
    %74 = tpu.dynamic_rotate %68 by %c511_i32_34 dim 1 : vector<4x512xf32>, i32 -> vector<4x512xf32>
    %75 = arith.select %12, %74, %73 : vector<4x512xi1>, vector<4x512xf32>
    %c511_i32_35 = arith.constant 511 : i32
    %76 = tpu.dynamic_rotate %68 by %c511_i32_35 dim 1 : vector<4x512xf32>, i32 -> vector<4x512xf32>
    %c1_i32_36 = arith.constant 1 : i32
    %77 = tpu.dynamic_rotate %68 by %c1_i32_36 dim 1 : vector<4x512xf32>, i32 -> vector<4x512xf32>
    %78 = arith.select %14, %77, %76 : vector<4x512xi1>, vector<4x512xf32>
    %c496_i32_37 = arith.constant 496 : i32
    %79 = tpu.dynamic_rotate %75 by %c496_i32_37 dim 1 : vector<4x512xf32>, i32 -> vector<4x512xf32>
    %c16_i32_38 = arith.constant 16 : i32
    %80 = tpu.dynamic_rotate %75 by %c16_i32_38 dim 1 : vector<4x512xf32>, i32 -> vector<4x512xf32>
    %81 = arith.select %8, %79, %80 : vector<4x512xi1>, vector<4x512xf32>
    %82 = arith.select %10, %80, %79 : vector<4x512xi1>, vector<4x512xf32>
    %c496_i32_39 = arith.constant 496 : i32
    %83 = tpu.dynamic_rotate %68 by %c496_i32_39 dim 1 : vector<4x512xf32>, i32 -> vector<4x512xf32>
    %c16_i32_40 = arith.constant 16 : i32
    %84 = tpu.dynamic_rotate %68 by %c16_i32_40 dim 1 : vector<4x512xf32>, i32 -> vector<4x512xf32>
    %85 = arith.select %8, %83, %84 : vector<4x512xi1>, vector<4x512xf32>
    %86 = arith.select %10, %84, %83 : vector<4x512xi1>, vector<4x512xf32>
    %c496_i32_41 = arith.constant 496 : i32
    %87 = tpu.dynamic_rotate %78 by %c496_i32_41 dim 1 : vector<4x512xf32>, i32 -> vector<4x512xf32>
    %c16_i32_42 = arith.constant 16 : i32
    %88 = tpu.dynamic_rotate %78 by %c16_i32_42 dim 1 : vector<4x512xf32>, i32 -> vector<4x512xf32>
    %89 = arith.select %8, %87, %88 : vector<4x512xi1>, vector<4x512xf32>
    %90 = arith.select %10, %88, %87 : vector<4x512xi1>, vector<4x512xf32>
    %91 = tpu.concatenate %81, %85, %89, %75, %68, %78, %82, %86, %90 in 0 : vector<4x512xf32>, vector<4x512xf32>, vector<4x512xf32>, vector<4x512xf32>, vector<4x512xf32>, vector<4x512xf32>, vector<4x512xf32>, vector<4x512xf32>, vector<4x512xf32> -> vector<36x512xf32>
    %cst_43 = arith.constant dense<0.000000e+00> : vector<4x512xf32>
    %92 = tpu.matmul %70, %91, %cst_43 {dimension_numbers = #tpu.dot_dimension_numbers<[1], [0], [0], [1], [0, 0, 1, 1], [], []>} : vector<4x36xf32>, vector<36x512xf32>, vector<4x512xf32> -> vector<4x512xf32>
    %cst_44 = arith.constant dense<0.000000e+00> : vector<4xf32>
    %93 = vector.multi_reduction <add>, %92, %cst_44 [1] : vector<4x512xf32> to vector<4xf32>
    %94 = vector.shape_cast %93 : vector<4xf32> to vector<4x1xf32>
    %95 = arith.mulf %92, %92 : vector<4x512xf32>
    %cst_45 = arith.constant dense<0.000000e+00> : vector<4xf32>
    %96 = vector.multi_reduction <add>, %95, %cst_45 [1] : vector<4x512xf32> to vector<4xf32>
    %97 = vector.shape_cast %96 : vector<4xf32> to vector<4x1xf32>
    %cst_46 = arith.constant 0.001953125 : f32
    %98 = vector.broadcast %cst_46 : f32 to vector<4x1xf32>
    %99 = arith.mulf %94, %98 : vector<4x1xf32>
    %cst_47 = arith.constant 0.001953125 : f32
    %100 = vector.broadcast %cst_47 : f32 to vector<4x1xf32>
    %101 = arith.mulf %97, %100 : vector<4x1xf32>
    %102 = arith.mulf %99, %99 : vector<4x1xf32>
    %103 = arith.subf %101, %102 : vector<4x1xf32>
    %cst_48 = arith.constant 0.000000e+00 : f32
    %104 = vector.broadcast %cst_48 : f32 to vector<4x1xf32>
    %105 = arith.maximumf %103, %104 : vector<4x1xf32>
    %cst_49 = arith.constant 9.99999974E-6 : f32
    %106 = vector.broadcast %cst_49 : f32 to vector<4x1xf32>
    %107 = arith.addf %105, %106 : vector<4x1xf32>
    %108 = math.rsqrt %107 : vector<4x1xf32>
    %109 = arith.mulf %71, %108 : vector<4x1xf32>
    %110 = arith.mulf %99, %109 : vector<4x1xf32>
    %111 = arith.subf %72, %110 : vector<4x1xf32>
    %112 = vector.broadcast %109 : vector<4x1xf32> to vector<4x512xf32>
    %113 = arith.mulf %92, %112 : vector<4x512xf32>
    %114 = vector.broadcast %111 : vector<4x1xf32> to vector<4x512xf32>
    %115 = arith.addf %113, %114 : vector<4x512xf32>
    %116 = arith.addf %19, %115 : vector<4x512xf32>
    %117 = vector.extract_strided_slice %116 {offsets = [0, 0], sizes = [4, 256], strides = [1, 1]} : vector<4x512xf32> to vector<4x256xf32>
    %c0_50 = arith.constant 0 : index
    %c0_51 = arith.constant 0 : index
    %c0_52 = arith.constant 0 : index
    %118 = vector.load %arg3[%c0_50, %c0_51, %c0_52] : memref<2x4x256xf32, #tpu.memory_space<vmem>>, vector<1x4x256xf32>
    %119 = vector.shape_cast %118 : vector<1x4x256xf32> to vector<4x256xf32>
    %120 = vector.shape_cast %117 : vector<4x256xf32> to vector<1x4x256xf32>
    tpu.vector_store %arg3[%c0_50, %c0_51, %c0_52], %120 {strides = array<i32>} : memref<2x4x256xf32, #tpu.memory_space<vmem>>, vector<1x4x256xf32>,
    %121 = vector.extract_strided_slice %116 {offsets = [0, 256], sizes = [4, 256], strides = [1, 1]} : vector<4x512xf32> to vector<4x256xf32>
    %c1_53 = arith.constant 1 : index
    %c0_54 = arith.constant 0 : index
    %c0_55 = arith.constant 0 : index
    %122 = vector.load %arg3[%c1_53, %c0_54, %c0_55] : memref<2x4x256xf32, #tpu.memory_space<vmem>>, vector<1x4x256xf32>
    %123 = vector.shape_cast %122 : vector<1x4x256xf32> to vector<4x256xf32>
    %124 = vector.shape_cast %121 : vector<4x256xf32> to vector<1x4x256xf32>
    tpu.vector_store %arg3[%c1_53, %c0_54, %c0_55], %124 {strides = array<i32>} : memref<2x4x256xf32, #tpu.memory_space<vmem>>, vector<1x4x256xf32>,
    return
  }
}

</mosaic_0001>

<llo_original>
// kernel: tpu_custom_call.1
$region0: #{tpu_custom_call.1}
  #allocation0 [shape = 'u32[]', space=smem, size = 0x4, offset = 0x4, fixed_abs, tag = 'smem constant byte address 0x4 - core index']
  #allocation1 [shape = 'u32[144,128]{1,0:T(1,128)}', space=vmem, size = 0x12000, scoped, tag = 'internal scratch']
  %s0 = inlined_call_operand.hbm [shape: f32[2,4,256], index: 0, kind: input, shape index: {}]
  %s1 = inlined_call_operand.hbm [shape: f32[2,4,36], index: 1, kind: input, shape index: {}]
  %s2 = inlined_call_operand.vmem [shape: f32[4,4], index: 2, kind: input, shape index: {}]
  %s3 = inlined_call_operand.hbm [shape: f32[2,4,256], index: 3, kind: output, shape index: {}]
  %s4 = sld [smem:[#allocation0]]
  $region30: #{tpu_custom_call.1} parent=0
    _
  %s6 = ssub.s32 1, %s4
  %s7 = scalar_select 0, %s6, %s4
  $region1: #{tpu_custom_call.1} parent=0
    #allocation2 [shape = 'u8[8192]{0}', space=vmem, size = 0x2000, scoped, tag = 'input window, operand 0, single buffered']
    #allocation3 [shape = 's32[1]{0}', space=sflag, size = 0x4, scoped, tag = 'scoped memory for tpu_custom_call.1']
    #allocation4 [shape = 's32[1]{0}', space=sflag, size = 0x4, scoped, tag = 'scoped memory for tpu_custom_call.1']
    #allocation5 [shape = 'u8[4096]{0}', space=vmem, size = 0x1000, scoped, tag = 'input window, operand 1, single buffered']
    #allocation6 [shape = 's32[1]{0}', space=sflag, size = 0x4, scoped, tag = 'scoped memory for tpu_custom_call.1']
    #allocation7 [shape = 'u8[8192]{0}', space=vmem, size = 0x2000, scoped, tag = 'output window, operand 0, single buffered']
    %8 = vsyncpa [#allocation3], 0
    %9 = vsyncpa [#allocation6], 0
    %10 = vsyncpa [#allocation4], 0
    // Predicated region
    $region2: #{tpu_custom_call.1} parent=1 // pred_check
      _
    $region3: #{tpu_custom_call.1} parent=1 // pred_check_branch
      %12 = sbr.rel (0) target = $region5
    $region4: #{tpu_custom_call.1} parent=1 // pred_region
      %s14 = ssub.s32 256, 256
      %15 = vsyncadd [#allocation3], %s14
      %s16 = sshll.u32 [#allocation2], 4
      %s17 = int_to_ptr.vmem [resolvable:$true] %s16
      %22 = dma.hbm_to_vmem [thread:$0]  %s0, 256, %s17, [#allocation3], 128, 128, 8
    $region5: #{tpu_custom_call.1} parent=1 // pred_fallthru
      _
    // Predicated region
    $region6: #{tpu_custom_call.1} parent=1 // pred_check
      _
    $region7: #{tpu_custom_call.1} parent=1 // pred_check_branch
      %24 = sbr.rel (0) target = $region9
    $region8: #{tpu_custom_call.1} parent=1 // pred_region
      %s26 = ssub.s32 128, 128
      %27 = vsyncadd [#allocation6], %s26
      %s28 = sshll.u32 [#allocation5], 4
      %s29 = int_to_ptr.vmem [resolvable:$true] %s28
      %34 = dma.hbm_to_vmem [thread:$0]  %s1, 128, %s29, [#allocation6], 64, 64, 4
    $region9: #{tpu_custom_call.1} parent=1 // pred_fallthru
      _
    // Predicated region
    $region10: #{tpu_custom_call.1} parent=1 // pred_check
      _
    $region11: #{tpu_custom_call.1} parent=1 // pred_check_branch
      %36 = sbr.rel (0) target = $region13
    $region12: #{tpu_custom_call.1} parent=1 // pred_region
      _
    $region13: #{tpu_custom_call.1} parent=1 // pred_fallthru
      _
    // Predicated region
    $region14: #{tpu_custom_call.1} parent=1 // pred_check
      _
    $region15: #{tpu_custom_call.1} parent=1 // pred_check_branch
      %38 = sbr.rel (0) target = $region17
    $region16: #{tpu_custom_call.1} parent=1 // pred_region
      %39 = dma.done [#allocation3], 256
    $region17: #{tpu_custom_call.1} parent=1 // pred_fallthru
      _
    // Predicated region
    $region18: #{tpu_custom_call.1} parent=1 // pred_check
      _
    $region19: #{tpu_custom_call.1} parent=1 // pred_check_branch
      %41 = sbr.rel (0) target = $region21
    $region20: #{tpu_custom_call.1} parent=1 // pred_region
      %42 = dma.done [#allocation6], 128
    $region21: #{tpu_custom_call.1} parent=1 // pred_fallthru
      _
    %v43 = vlaneseq
    %v44 = vand.u32 %v43, 127
    %v45 = vadd.s32 %v44, 128
    %v46 = vadd.s32 %v44, 256
    %v47 = vadd.s32 %v44, 384
    %v48 = vand.u32 %v44, 15
    %v49 = vand.u32 %v45, 15
    %v50 = vand.u32 %v46, 15
    %v51 = vand.u32 %v47, 15
    %v52 = vshra.s32 %v44, 4
    %v53 = vshra.s32 %v45, 4
    %v54 = vshra.s32 %v46, 4
    %v55 = vshra.s32 %v47, 4
    %v56 = vand.u32 %v52, 15
    %v57 = vand.u32 %v53, 15
    %v58 = vand.u32 %v54, 15
    %v59 = vand.u32 %v55, 15
    %vm60 = vcmp.eq.s32.totalorder %v56, 0
    %vm61 = vcmp.eq.s32.totalorder %v57, 0
    %vm62 = vcmp.eq.s32.totalorder %v58, 0
    %vm63 = vcmp.eq.s32.totalorder %v59, 0
    %vm64 = vcmp.eq.s32.totalorder %v56, 15
    %vm65 = vcmp.eq.s32.totalorder %v57, 15
    %vm66 = vcmp.eq.s32.totalorder %v58, 15
    %vm67 = vcmp.eq.s32.totalorder %v59, 15
    %vm68 = vcmp.eq.s32.totalorder %v48, 0
    %vm69 = vcmp.eq.s32.totalorder %v49, 0
    %vm70 = vcmp.eq.s32.totalorder %v50, 0
    %vm71 = vcmp.eq.s32.totalorder %v51, 0
    %vm72 = vcmp.eq.s32.totalorder %v48, 15
    %vm73 = vcmp.eq.s32.totalorder %v49, 15
    %vm74 = vcmp.eq.s32.totalorder %v50, 15
    %vm75 = vcmp.eq.s32.totalorder %v51, 15
    %v76 = vld [vmem:[#allocation2] sm:$0xff]
    %s77 = scalar_lea.vmem [#allocation2], 8
    %v78 = vld [vmem:[%s77] sm:$0xff]
    %v80 = vcombine.high %v76, %v76
    %v83 = vcombine.high %v78, %v78
    %v85 = vld [vmem:[#allocation5] sm:$0xf]
    %v86 = vld [vmem:[%s2] sm:$0xf]
    %87 = vrot.lane.b32.xlu0 %v76, 1
    %v88 = vpop.permute.xlu0 %87
    %89 = vrot.lane.b32.xlu0 %v80, 1
    %v90 = vpop.permute.xlu0 %89
    %91 = vrot.lane.b32.xlu0 %v78, 1
    %v92 = vpop.permute.xlu0 %91
    %93 = vrot.lane.b32.xlu0 %v83, 1
    %v94 = vpop.permute.xlu0 %93
    %vm95 = vcmp.lt.s32.totalorder %v44, 1
    %v96 = vsel %vm95, %v92, %v94
    %v97 = vsel %vm95, %v90, %v92
    %v98 = vsel %vm95, %v88, %v90
    %v99 = vsel %vm95, %v94, %v88
    %100 = vrot.lane.b32.xlu0 %v76, 127
    %v101 = vpop.permute.xlu0 %100
    %102 = vrot.lane.b32.xlu0 %v80, 127
    %v103 = vpop.permute.xlu0 %102
    %104 = vrot.lane.b32.xlu0 %v78, 127
    %v105 = vpop.permute.xlu0 %104
    %106 = vrot.lane.b32.xlu0 %v83, 127
    %v107 = vpop.permute.xlu0 %106
    %vm108 = vcmp.lt.s32.totalorder %v44, 127
    %v109 = vsel %vm108, %v105, %v107
    %v110 = vsel %vm108, %v103, %v105
    %v111 = vsel %vm108, %v101, %v103
    %v112 = vsel %vm108, %v107, %v101
    %v113 = vsel %vm68, %v111, %v99
    %v114 = vsel %vm69, %v110, %v98
    %v115 = vsel %vm70, %v109, %v97
    %v116 = vsel %vm71, %v112, %v96
    %v117 = vsel %vm72, %v99, %v111
    %v118 = vsel %vm73, %v98, %v110
    %v119 = vsel %vm74, %v97, %v109
    %v120 = vsel %vm75, %v96, %v112
    %121 = vrot.lane.b32.xlu0 %v113, 112
    %v122 = vpop.permute.xlu0 %121
    %123 = vrot.lane.b32.xlu0 %v114, 112
    %v124 = vpop.permute.xlu0 %123
    %125 = vrot.lane.b32.xlu0 %v115, 112
    %v126 = vpop.permute.xlu0 %125
    %127 = vrot.lane.b32.xlu0 %v116, 112
    %v128 = vpop.permute.xlu0 %127
    %vm129 = vcmp.lt.s32.totalorder %v44, 112
    %v130 = vsel %vm129, %v126, %v128
    %v131 = vsel %vm129, %v124, %v126
    %v132 = vsel %vm129, %v122, %v124
    %v133 = vsel %vm129, %v128, %v122
    %134 = vrot.lane.b32.xlu0 %v113, 16
    %v135 = vpop.permute.xlu0 %134
    %136 = vrot.lane.b32.xlu0 %v114, 16
    %v137 = vpop.permute.xlu0 %136
    %138 = vrot.lane.b32.xlu0 %v115, 16
    %v139 = vpop.permute.xlu0 %138
    %140 = vrot.lane.b32.xlu0 %v116, 16
    %v141 = vpop.permute.xlu0 %140
    %vm142 = vcmp.lt.s32.totalorder %v44, 16
    %v143 = vsel %vm142, %v139, %v141
    %v144 = vsel %vm142, %v137, %v139
    %v145 = vsel %vm142, %v135, %v137
    %v146 = vsel %vm142, %v141, %v135
    %v147 = vsel %vm60, %v132, %v146
    %v148 = vsel %vm61, %v131, %v145
    %v149 = vsel %vm62, %v130, %v144
    %v150 = vsel %vm63, %v133, %v143
    %v151 = vsel %vm64, %v146, %v132
    %v152 = vsel %vm65, %v145, %v131
    %v153 = vsel %vm66, %v144, %v130
    %v154 = vsel %vm67, %v143, %v133
    %155 = vrot.lane.b32.xlu0 %v76, 112
    %v156 = vpop.permute.xlu0 %155
    %157 = vrot.lane.b32.xlu0 %v80, 112
    %v158 = vpop.permute.xlu0 %157
    %159 = vrot.lane.b32.xlu0 %v78, 112
    %v160 = vpop.permute.xlu0 %159
    %161 = vrot.lane.b32.xlu0 %v83, 112
    %v162 = vpop.permute.xlu0 %161
    %v163 = vsel %vm129, %v160, %v162
    %v164 = vsel %vm129, %v158, %v160
    %v165 = vsel %vm129, %v156, %v158
    %v166 = vsel %vm129, %v162, %v156
    %167 = vrot.lane.b32.xlu0 %v76, 16
    %v168 = vpop.permute.xlu0 %167
    %169 = vrot.lane.b32.xlu0 %v80, 16
    %v170 = vpop.permute.xlu0 %169
    %171 = vrot.lane.b32.xlu0 %v78, 16
    %v172 = vpop.permute.xlu0 %171
    %173 = vrot.lane.b32.xlu0 %v83, 16
    %v174 = vpop.permute.xlu0 %173
    %v175 = vsel %vm142, %v172, %v174
    %v176 = vsel %vm142, %v170, %v172
    %v177 = vsel %vm142, %v168, %v170
    %v178 = vsel %vm142, %v174, %v168
    %v179 = vsel %vm60, %v165, %v178
    %v180 = vsel %vm61, %v164, %v177
    %v181 = vsel %vm62, %v163, %v176
    %v182 = vsel %vm63, %v166, %v175
    %v183 = vsel %vm64, %v178, %v165
    %v184 = vsel %vm65, %v177, %v164
    %v185 = vsel %vm66, %v176, %v163
    %v186 = vsel %vm67, %v175, %v166
    %187 = vrot.lane.b32.xlu0 %v117, 112
    %v188 = vpop.permute.xlu0 %187
    %189 = vrot.lane.b32.xlu0 %v118, 112
    %v190 = vpop.permute.xlu0 %189
    %191 = vrot.lane.b32.xlu0 %v119, 112
    %v192 = vpop.permute.xlu0 %191
    %193 = vrot.lane.b32.xlu0 %v120, 112
    %v194 = vpop.permute.xlu0 %193
    %v195 = vsel %vm129, %v192, %v194
    %v196 = vsel %vm129, %v190, %v192
    %v197 = vsel %vm129, %v188, %v190
    %v198 = vsel %vm129, %v194, %v188
    %199 = vrot.lane.b32.xlu0 %v117, 16
    %v200 = vpop.permute.xlu0 %199
    %201 = vrot.lane.b32.xlu0 %v118, 16
    %v202 = vpop.permute.xlu0 %201
    %203 = vrot.lane.b32.xlu0 %v119, 16
    %v204 = vpop.permute.xlu0 %203
    %205 = vrot.lane.b32.xlu0 %v120, 16
    %v206 = vpop.permute.xlu0 %205
    %v207 = vsel %vm142, %v204, %v206
    %v208 = vsel %vm142, %v202, %v204
    %v209 = vsel %vm142, %v200, %v202
    %v210 = vsel %vm142, %v206, %v200
    %v211 = vsel %vm60, %v197, %v210
    %v212 = vsel %vm61, %v196, %v209
    %v213 = vsel %vm62, %v195, %v208
    %v214 = vsel %vm63, %v198, %v207
    %v215 = vsel %vm64, %v210, %v197
    %v216 = vsel %vm65, %v209, %v196
    %v217 = vsel %vm66, %v208, %v195
    %v218 = vsel %vm67, %v207, %v198
    %v223 = vrot.slane %v179, 4
    %v224 = vrot.slane %v180, 4
    %v225 = vrot.slane %v181, 4
    %v226 = vrot.slane %v182, 4
    %v235 = vrot.slane %v113, 4
    %v236 = vrot.slane %v114, 4
    %v237 = vrot.slane %v115, 4
    %v238 = vrot.slane %v116, 4
    %v247 = vrot.slane %v117, 4
    %v248 = vrot.slane %v118, 4
    %v249 = vrot.slane %v119, 4
    %v250 = vrot.slane %v120, 4
    %v259 = vrot.slane %v183, 4
    %v260 = vrot.slane %v184, 4
    %v261 = vrot.slane %v185, 4
    %v262 = vrot.slane %v186, 4
    %vm267 = vcmask 1043456
    %v268 = vsel %vm267, %v147, %v223
    %v269 = vsel %vm267, %v148, %v224
    %v270 = vsel %vm267, %v149, %v225
    %v271 = vsel %vm267, %v150, %v226
    %v272 = vsel %vm267, %v211, %v235
    %v273 = vsel %vm267, %v212, %v236
    %v274 = vsel %vm267, %v213, %v237
    %v275 = vsel %vm267, %v214, %v238
    %v276 = vsel %vm267, %v76, %v247
    %v277 = vsel %vm267, %v80, %v248
    %v278 = vsel %vm267, %v78, %v249
    %v279 = vsel %vm267, %v83, %v250
    %v280 = vsel %vm267, %v151, %v259
    %v281 = vsel %vm267, %v152, %v260
    %v282 = vsel %vm267, %v153, %v261
    %v283 = vsel %vm267, %v154, %v262
    %vm284 = vcmask 293888
    %v286 = vsel %vm284, %v85, 0
    %v289 = vsel %vm267, %v215, 0
    %v292 = vsel %vm267, %v216, 0
    %v295 = vsel %vm267, %v217, 0
    %v298 = vsel %vm267, %v218, 0
    %300 = vmatprep.subr.mxu0 %v269
    %301 = vmatpush1.msra.mxu0 %v268
    %302 = vmatprep.subr.mxu0 %v273
    %303 = vmatpush1.msra.mxu0 %v272
    %304 = vmatprep.subr.mxu0 %v277
    %305 = vmatpush1.msra.mxu0 %v276
    %306 = vmatprep.subr.mxu0 %v281
    %307 = vmatpush1.msra.mxu0 %v280
    %308 = vmatprep.subr.mxu0 %v292
    %309 = vmatpush1.msra.mxu0 %v289
    %310 = vmatprep.subr.mxu0 0.0
    %311 = vmatpush1.msra.mxu0 0.0
    %312 = vmatprep.subr.mxu0 0.0
    %313 = vmatpush1.msra.mxu0 0.0
    %314 = vmatprep.subr.mxu0 0.0
    %315 = vmatpush1.msra.mxu0 0.0
    %316 = vmatprep.subr.mxu0 0.0
    %317 = vmatpush1.msra.mxu0 0.0
    %318 = vmatprep.subr.mxu0 0.0
    %319 = vmatpush1.msra.mxu0 0.0
    %320 = vmatprep.subr.mxu0 0.0
    %321 = vmatpush1.msra.mxu0 0.0
    %322 = vmatprep.subr.mxu0 0.0
    %323 = vmatpush1.msra.mxu0 0.0
    %324 = vmatprep.subr.mxu0 0.0
    %325 = vmatpush1.msra.mxu0 0.0
    %326 = vmatprep.subr.mxu0 0.0
    %327 = vmatpush1.msra.mxu0 0.0
    %328 = vmatprep.subr.mxu0 0.0
    %329 = vmatpush1.msra.mxu0 0.0
    %330 = vmatprep.subr.mxu0 0.0
    %331 = vmatpush1.msra.mxu0 0.0
    %332 = vmatprep.subr.mxu0 0.0
    %333 = vmatpush1.msra.mxu0 0.0
    %334 = vmatprep.subr.mxu0 0.0
    %335 = vmatpush1.msra.mxu0 0.0
    %336 = vmatprep.subr.mxu0 0.0
    %337 = vmatpush1.msra.mxu0 0.0
    %338 = vmatprep.subr.mxu0 0.0
    %339 = vmatpush1.msra.mxu0 0.0
    %340 = vmatprep.subr.mxu0 0.0
    %341 = vmatpush1.msra.mxu0 0.0
    %342 = vmatprep.subr.mxu0 0.0
    %343 = vmatpush1.msra.mxu0 0.0
    %344 = vmatprep.subr.mxu0 0.0
    %345 = vmatpush1.msra.mxu0 0.0
    %346 = vmatprep.subr.mxu0 0.0
    %347 = vmatpush1.msra.mxu0 0.0
    %348 = vmatprep.subr.mxu0 0.0
    %349 = vmatpush1.msra.mxu0 0.0
    %350 = vmatprep.subr.mxu0 0.0
    %351 = vmatpush1.msra.mxu0 0.0
    %352 = vmatprep.subr.mxu0 0.0
    %353 = vmatpush1.msra.mxu0 0.0
    %354 = vmatprep.subr.mxu0 0.0
    %355 = vmatpush1.msra.mxu0 0.0
    %356 = vmatprep.subr.mxu0 0.0
    %357 = vmatpush1.msra.mxu0 0.0
    %358 = vmatprep.subr.mxu0 0.0
    %359 = vmatpush1.msra.mxu0 0.0
    %360 = vmatprep.subr.mxu0 0.0
    %361 = vmatpush1.msra.mxu0 0.0
    %362 = vmatprep.subr.mxu0 0.0
    %363 = vmatpush1.msra.mxu0 0.0
    %364 = vmatprep.mubr.f32.mxu0 0.0
    %365 = vmatmul.mubr.f32.gmra.mrb[0].mxu0 %v286
    %v366 = vpop.f32.mrb[0].mxu0
    %v367 = vadd.f32 0.0, %v366
    %v368 = vpop.f32.mrb[0].mxu0
    %v369 = vadd.f32 0.0, %v368
    %370 = vdwg.mxu0
    %371 = vmatprep.subr.mxu0 %v271
    %372 = vmatpush1.msra.mxu0 %v270
    %373 = vmatprep.subr.mxu0 %v275
    %374 = vmatpush1.msra.mxu0 %v274
    %375 = vmatprep.subr.mxu0 %v279
    %376 = vmatpush1.msra.mxu0 %v278
    %377 = vmatprep.subr.mxu0 %v283
    %378 = vmatpush1.msra.mxu0 %v282
    %379 = vmatprep.subr.mxu0 %v298
    %380 = vmatpush1.msra.mxu0 %v295
    %381 = vmatprep.subr.mxu0 0.0
    %382 = vmatpush1.msra.mxu0 0.0
    %383 = vmatprep.subr.mxu0 0.0
    %384 = vmatpush1.msra.mxu0 0.0
    %385 = vmatprep.subr.mxu0 0.0
    %386 = vmatpush1.msra.mxu0 0.0
    %387 = vmatprep.subr.mxu0 0.0
    %388 = vmatpush1.msra.mxu0 0.0
    %389 = vmatprep.subr.mxu0 0.0
    %390 = vmatpush1.msra.mxu0 0.0
    %391 = vmatprep.subr.mxu0 0.0
    %392 = vmatpush1.msra.mxu0 0.0
    %393 = vmatprep.subr.mxu0 0.0
    %394 = vmatpush1.msra.mxu0 0.0
    %395 = vmatprep.subr.mxu0 0.0
    %396 = vmatpush1.msra.mxu0 0.0
    %397 = vmatprep.subr.mxu0 0.0
    %398 = vmatpush1.msra.mxu0 0.0
    %399 = vmatprep.subr.mxu0 0.0
    %400 = vmatpush1.msra.mxu0 0.0
    %401 = vmatprep.subr.mxu0 0.0
    %402 = vmatpush1.msra.mxu0 0.0
    %403 = vmatprep.subr.mxu0 0.0
    %404 = vmatpush1.msra.mxu0 0.0
    %405 = vmatprep.subr.mxu0 0.0
    %406 = vmatpush1.msra.mxu0 0.0
    %407 = vmatprep.subr.mxu0 0.0
    %408 = vmatpush1.msra.mxu0 0.0
    %409 = vmatprep.subr.mxu0 0.0
    %410 = vmatpush1.msra.mxu0 0.0
    %411 = vmatprep.subr.mxu0 0.0
    %412 = vmatpush1.msra.mxu0 0.0
    %413 = vmatprep.subr.mxu0 0.0
    %414 = vmatpush1.msra.mxu0 0.0
    %415 = vmatprep.subr.mxu0 0.0
    %416 = vmatpush1.msra.mxu0 0.0
    %417 = vmatprep.subr.mxu0 0.0
    %418 = vmatpush1.msra.mxu0 0.0
    %419 = vmatprep.subr.mxu0 0.0
    %420 = vmatpush1.msra.mxu0 0.0
    %421 = vmatprep.subr.mxu0 0.0
    %422 = vmatpush1.msra.mxu0 0.0
    %423 = vmatprep.subr.mxu0 0.0
    %424 = vmatpush1.msra.mxu0 0.0
    %425 = vmatprep.subr.mxu0 0.0
    %426 = vmatpush1.msra.mxu0 0.0
    %427 = vmatprep.subr.mxu0 0.0
    %428 = vmatpush1.msra.mxu0 0.0
    %429 = vmatprep.subr.mxu0 0.0
    %430 = vmatpush1.msra.mxu0 0.0
    %431 = vmatprep.subr.mxu0 0.0
    %432 = vmatpush1.msra.mxu0 0.0
    %433 = vmatprep.subr.mxu0 0.0
    %434 = vmatpush1.msra.mxu0 0.0
    %435 = vmatprep.mubr.f32.mxu0 0.0
    %436 = vmatmul.mubr.f32.gmra.mrb[0].mxu0 %v286
    %v437 = vpop.f32.mrb[0].mxu0
    %v438 = vadd.f32 0.0, %v437
    %v439 = vpop.f32.mrb[0].mxu0
    %v440 = vadd.f32 0.0, %v439
    %441 = vdwg.mxu0
    %v442 = vsel %vm267, %v367, 0.0
    %v443 = vsel %vm267, %v369, 0.0
    %v444 = vadd.f32 %v442, %v443
    %v445 = vsel %vm267, %v438, 0.0
    %v446 = vadd.f32 %v444, %v445
    %v447 = vsel %vm267, %v440, 0.0
    %v448 = vadd.f32 %v446, %v447
    %449 = vadd.xlane.f32.xlu0 %v448
    %v450 = vpop.xlane.xlu0 %449
    %v451 = vmul.f32 %v367, %v367
    %v452 = vmul.f32 %v369, %v369
    %v453 = vmul.f32 %v438, %v438
    %v454 = vmul.f32 %v440, %v440
    %v455 = vsel %vm267, %v451, 0.0
    %v456 = vsel %vm267, %v452, 0.0
    %v457 = vadd.f32 %v455, %v456
    %v458 = vsel %vm267, %v453, 0.0
    %v459 = vadd.f32 %v457, %v458
    %v460 = vsel %vm267, %v454, 0.0
    %v461 = vadd.f32 %v459, %v460
    %462 = vadd.xlane.f32.xlu0 %v461
    %v463 = vpop.xlane.xlu0 %462
    %v464 = vmul.f32 %v450, 0.001953125
    %v465 = vmul.f32 %v463, 0.001953125
    %v466 = vmul.f32 %v464, %v464
    %v467 = vsub.f32 %v465, %v466
    %v468 = vmax.f32 %v467, 0.0
    %v469 = vadd.f32 %v468, 1e-05
    %v470 = vrsqrt.pop %v469
    %v471 = vmul.f32 %v86, %v470
    %v472 = vmul.f32 %v464, %v471
    %474 = vrot.lane.b32.xlu0 %v472, 1
    %v475 = vpop.permute.xlu0 %474
    %v477 = vsub.f32 %v86, %v475
    %479 = vset.pattern.permute.xlu0 0
    %480 = vperm.xlu0 %479, %v471
    %v481 = vpop.permute.xlu0 %480
    %v483 = vmul.f32 %v367, %v481
    %v484 = vmul.f32 %v369, %v481
    %v485 = vmul.f32 %v438, %v481
    %v486 = vmul.f32 %v440, %v481
    %488 = vset.pattern.permute.xlu0 1
    %489 = vperm.xlu0 %488, %v477
    %v490 = vpop.permute.xlu0 %489
    %v492 = vadd.f32 %v483, %v490
    %v493 = vadd.f32 %v484, %v490
    %v494 = vadd.f32 %v485, %v490
    %v495 = vadd.f32 %v486, %v490
    %v496 = vmax.f32 %v492, 0.0
    %v497 = vmax.f32 %v493, 0.0
    %v498 = vmax.f32 %v494, 0.0
    %v499 = vmax.f32 %v495, 0.0
    %s500 = scalar_lea.vmem [#allocation5], 4
    %v501 = vld [vmem:[%s500] sm:$0xf]
    %502 = vrot.lane.b32.xlu0 %v496, 1
    %v503 = vpop.permute.xlu0 %502
    %504 = vrot.lane.b32.xlu0 %v497, 1
    %v505 = vpop.permute.xlu0 %504
    %506 = vrot.lane.b32.xlu0 %v498, 1
    %v507 = vpop.permute.xlu0 %506
    %508 = vrot.lane.b32.xlu0 %v499, 1
    %v509 = vpop.permute.xlu0 %508
    %v510 = vsel %vm95, %v507, %v509
    %v511 = vsel %vm95, %v505, %v507
    %v512 = vsel %vm95, %v503, %v505
    %v513 = vsel %vm95, %v509, %v503
    %514 = vrot.lane.b32.xlu0 %v496, 127
    %v515 = vpop.permute.xlu0 %514
    %516 = vrot.lane.b32.xlu0 %v497, 127
    %v517 = vpop.permute.xlu0 %516
    %518 = vrot.lane.b32.xlu0 %v498, 127
    %v519 = vpop.permute.xlu0 %518
    %520 = vrot.lane.b32.xlu0 %v499, 127
    %v521 = vpop.permute.xlu0 %520
    %v522 = vsel %vm108, %v519, %v521
    %v523 = vsel %vm108, %v517, %v519
    %v524 = vsel %vm108, %v515, %v517
    %v525 = vsel %vm108, %v521, %v515
    %v526 = vsel %vm68, %v524, %v513
    %v527 = vsel %vm69, %v523, %v512
    %v528 = vsel %vm70, %v522, %v511
    %v529 = vsel %vm71, %v525, %v510
    %v530 = vsel %vm72, %v513, %v524
    %v531 = vsel %vm73, %v512, %v523
    %v532 = vsel %vm74, %v511, %v522
    %v533 = vsel %vm75, %v510, %v525
    %534 = vrot.lane.b32.xlu0 %v526, 112
    %v535 = vpop.permute.xlu0 %534
    %536 = vrot.lane.b32.xlu0 %v527, 112
    %v537 = vpop.permute.xlu0 %536
    %538 = vrot.lane.b32.xlu0 %v528, 112
    %v539 = vpop.permute.xlu0 %538
    %540 = vrot.lane.b32.xlu0 %v529, 112
    %v541 = vpop.permute.xlu0 %540
    %v542 = vsel %vm129, %v539, %v541
    %v543 = vsel %vm129, %v537, %v539
    %v544 = vsel %vm129, %v535, %v537
    %v545 = vsel %vm129, %v541, %v535
    %546 = vrot.lane.b32.xlu0 %v526, 16
    %v547 = vpop.permute.xlu0 %546
    %548 = vrot.lane.b32.xlu0 %v527, 16
    %v549 = vpop.permute.xlu0 %548
    %550 = vrot.lane.b32.xlu0 %v528, 16
    %v551 = vpop.permute.xlu0 %550
    %552 = vrot.lane.b32.xlu0 %v529, 16
    %v553 = vpop.permute.xlu0 %552
    %v554 = vsel %vm142, %v551, %v553
    %v555 = vsel %vm142, %v549, %v551
    %v556 = vsel %vm142, %v547, %v549
    %v557 = vsel %vm142, %v553, %v547
    %v558 = vsel %vm60, %v544, %v557
    %v559 = vsel %vm61, %v543, %v556
    %v560 = vsel %vm62, %v542, %v555
    %v561 = vsel %vm63, %v545, %v554
    %v562 = vsel %vm64, %v557, %v544
    %v563 = vsel %vm65, %v556, %v543
    %v564 = vsel %vm66, %v555, %v542
    %v565 = vsel %vm67, %v554, %v545
    %566 = vrot.lane.b32.xlu0 %v496, 112
    %v567 = vpop.permute.xlu0 %566
    %568 = vrot.lane.b32.xlu0 %v497, 112
    %v569 = vpop.permute.xlu0 %568
    %570 = vrot.lane.b32.xlu0 %v498, 112
    %v571 = vpop.permute.xlu0 %570
    %572 = vrot.lane.b32.xlu0 %v499, 112
    %v573 = vpop.permute.xlu0 %572
    %v574 = vsel %vm129, %v571, %v573
    %v575 = vsel %vm129, %v569, %v571
    %v576 = vsel %vm129, %v567, %v569
    %v577 = vsel %vm129, %v573, %v567
    %578 = vrot.lane.b32.xlu0 %v496, 16
    %v579 = vpop.permute.xlu0 %578
    %580 = vrot.lane.b32.xlu0 %v497, 16
    %v581 = vpop.permute.xlu0 %580
    %582 = vrot.lane.b32.xlu0 %v498, 16
    %v583 = vpop.permute.xlu0 %582
    %584 = vrot.lane.b32.xlu0 %v499, 16
    %v585 = vpop.permute.xlu0 %584
    %v586 = vsel %vm142, %v583, %v585
    %v587 = vsel %vm142, %v581, %v583
    %v588 = vsel %vm142, %v579, %v581
    %v589 = vsel %vm142, %v585, %v579
    %v590 = vsel %vm60, %v576, %v589
    %v591 = vsel %vm61, %v575, %v588
    %v592 = vsel %vm62, %v574, %v587
    %v593 = vsel %vm63, %v577, %v586
    %v594 = vsel %vm64, %v589, %v576
    %v595 = vsel %vm65, %v588, %v575
    %v596 = vsel %vm66, %v587, %v574
    %v597 = vsel %vm67, %v586, %v577
    %598 = vrot.lane.b32.xlu0 %v530, 112
    %v599 = vpop.permute.xlu0 %598
    %600 = vrot.lane.b32.xlu0 %v531, 112
    %v601 = vpop.permute.xlu0 %600
    %602 = vrot.lane.b32.xlu0 %v532, 112
    %v603 = vpop.permute.xlu0 %602
    %604 = vrot.lane.b32.xlu0 %v533, 112
    %v605 = vpop.permute.xlu0 %604
    %v606 = vsel %vm129, %v603, %v605
    %v607 = vsel %vm129, %v601, %v603
    %v608 = vsel %vm129, %v599, %v601
    %v609 = vsel %vm129, %v605, %v599
    %610 = vrot.lane.b32.xlu0 %v530, 16
    %v611 = vpop.permute.xlu0 %610
    %612 = vrot.lane.b32.xlu0 %v531, 16
    %v613 = vpop.permute.xlu0 %612
    %614 = vrot.lane.b32.xlu0 %v532, 16
    %v615 = vpop.permute.xlu0 %614
    %616 = vrot.lane.b32.xlu0 %v533, 16
    %v617 = vpop.permute.xlu0 %616
    %v618 = vsel %vm142, %v615, %v617
    %v619 = vsel %vm142, %v613, %v615
    %v620 = vsel %vm142, %v611, %v613
    %v621 = vsel %vm142, %v617, %v611
    %v622 = vsel %vm60, %v608, %v621
    %v623 = vsel %vm61, %v607, %v620
    %v624 = vsel %vm62, %v606, %v619
    %v625 = vsel %vm63, %v609, %v618
    %v626 = vsel %vm64, %v621, %v608
    %v627 = vsel %vm65, %v620, %v607
    %v628 = vsel %vm66, %v619, %v606
    %v629 = vsel %vm67, %v618, %v609
    %v634 = vrot.slane %v590, 4
    %v635 = vrot.slane %v591, 4
    %v636 = vrot.slane %v592, 4
    %v637 = vrot.slane %v593, 4
    %v646 = vrot.slane %v526, 4
    %v647 = vrot.slane %v527, 4
    %v648 = vrot.slane %v528, 4
    %v649 = vrot.slane %v529, 4
    %v658 = vrot.slane %v530, 4
    %v659 = vrot.slane %v531, 4
    %v660 = vrot.slane %v532, 4
    %v661 = vrot.slane %v533, 4
    %v670 = vrot.slane %v594, 4
    %v671 = vrot.slane %v595, 4
    %v672 = vrot.slane %v596, 4
    %v673 = vrot.slane %v597, 4
    %v678 = vsel %vm267, %v558, %v634
    %v679 = vsel %vm267, %v559, %v635
    %v680 = vsel %vm267, %v560, %v636
    %v681 = vsel %vm267, %v561, %v637
    %v682 = vsel %vm267, %v622, %v646
    %v683 = vsel %vm267, %v623, %v647
    %v684 = vsel %vm267, %v624, %v648
    %v685 = vsel %vm267, %v625, %v649
    %v686 = vsel %vm267, %v496, %v658
    %v687 = vsel %vm267, %v497, %v659
    %v688 = vsel %vm267, %v498, %v660
    %v689 = vsel %vm267, %v499, %v661
    %v690 = vsel %vm267, %v562, %v670
    %v691 = vsel %vm267, %v563, %v671
    %v692 = vsel %vm267, %v564, %v672
    %v693 = vsel %vm267, %v565, %v673
    %v695 = vsel %vm284, %v501, 0
    %v698 = vsel %vm267, %v626, 0
    %v701 = vsel %vm267, %v627, 0
    %v704 = vsel %vm267, %v628, 0
    %v707 = vsel %vm267, %v629, 0
    %709 = vmatprep.subr.mxu0 %v679
    %710 = vmatpush1.msra.mxu0 %v678
    %711 = vmatprep.subr.mxu0 %v683
    %712 = vmatpush1.msra.mxu0 %v682
    %713 = vmatprep.subr.mxu0 %v687
    %714 = vmatpush1.msra.mxu0 %v686
    %715 = vmatprep.subr.mxu0 %v691
    %716 = vmatpush1.msra.mxu0 %v690
    %717 = vmatprep.subr.mxu0 %v701
    %718 = vmatpush1.msra.mxu0 %v698
    %719 = vmatprep.subr.mxu0 0.0
    %720 = vmatpush1.msra.mxu0 0.0
    %721 = vmatprep.subr.mxu0 0.0
    %722 = vmatpush1.msra.mxu0 0.0
    %723 = vmatprep.subr.mxu0 0.0
    %724 = vmatpush1.msra.mxu0 0.0
    %725 = vmatprep.subr.mxu0 0.0
    %726 = vmatpush1.msra.mxu0 0.0
    %727 = vmatprep.subr.mxu0 0.0
    %728 = vmatpush1.msra.mxu0 0.0
    %729 = vmatprep.subr.mxu0 0.0
    %730 = vmatpush1.msra.mxu0 0.0
    %731 = vmatprep.subr.mxu0 0.0
    %732 = vmatpush1.msra.mxu0 0.0
    %733 = vmatprep.subr.mxu0 0.0
    %734 = vmatpush1.msra.mxu0 0.0
    %735 = vmatprep.subr.mxu0 0.0
    %736 = vmatpush1.msra.mxu0 0.0
    %737 = vmatprep.subr.mxu0 0.0
    %738 = vmatpush1.msra.mxu0 0.0
    %739 = vmatprep.subr.mxu0 0.0
    %740 = vmatpush1.msra.mxu0 0.0
    %741 = vmatprep.subr.mxu0 0.0
    %742 = vmatpush1.msra.mxu0 0.0
    %743 = vmatprep.subr.mxu0 0.0
    %744 = vmatpush1.msra.mxu0 0.0
    %745 = vmatprep.subr.mxu0 0.0
    %746 = vmatpush1.msra.mxu0 0.0
    %747 = vmatprep.subr.mxu0 0.0
    %748 = vmatpush1.msra.mxu0 0.0
    %749 = vmatprep.subr.mxu0 0.0
    %750 = vmatpush1.msra.mxu0 0.0
    %751 = vmatprep.subr.mxu0 0.0
    %752 = vmatpush1.msra.mxu0 0.0
    %753 = vmatprep.subr.mxu0 0.0
    %754 = vmatpush1.msra.mxu0 0.0
    %755 = vmatprep.subr.mxu0 0.0
    %756 = vmatpush1.msra.mxu0 0.0
    %757 = vmatprep.subr.mxu0 0.0
    %758 = vmatpush1.msra.mxu0 0.0
    %759 = vmatprep.subr.mxu0 0.0
    %760 = vmatpush1.msra.mxu0 0.0
    %761 = vmatprep.subr.mxu0 0.0
    %762 = vmatpush1.msra.mxu0 0.0
    %763 = vmatprep.subr.mxu0 0.0
    %764 = vmatpush1.msra.mxu0 0.0
    %765 = vmatprep.subr.mxu0 0.0
    %766 = vmatpush1.msra.mxu0 0.0
    %767 = vmatprep.subr.mxu0 0.0
    %768 = vmatpush1.msra.mxu0 0.0
    %769 = vmatprep.subr.mxu0 0.0
    %770 = vmatpush1.msra.mxu0 0.0
    %771 = vmatprep.subr.mxu0 0.0
    %772 = vmatpush1.msra.mxu0 0.0
    %773 = vmatprep.mubr.f32.mxu0 0.0
    %774 = vmatmul.mubr.f32.gmra.mrb[0].mxu0 %v695
    %v775 = vpop.f32.mrb[0].mxu0
    %v776 = vadd.f32 0.0, %v775
    %v777 = vpop.f32.mrb[0].mxu0
    %v778 = vadd.f32 0.0, %v777
    %779 = vdwg.mxu0
    %780 = vmatprep.subr.mxu0 %v681
    %781 = vmatpush1.msra.mxu0 %v680
    %782 = vmatprep.subr.mxu0 %v685
    %783 = vmatpush1.msra.mxu0 %v684
    %784 = vmatprep.subr.mxu0 %v689
    %785 = vmatpush1.msra.mxu0 %v688
    %786 = vmatprep.subr.mxu0 %v693
    %787 = vmatpush1.msra.mxu0 %v692
    %788 = vmatprep.subr.mxu0 %v707
    %789 = vmatpush1.msra.mxu0 %v704
    %790 = vmatprep.subr.mxu0 0.0
    %791 = vmatpush1.msra.mxu0 0.0
    %792 = vmatprep.subr.mxu0 0.0
    %793 = vmatpush1.msra.mxu0 0.0
    %794 = vmatprep.subr.mxu0 0.0
    %795 = vmatpush1.msra.mxu0 0.0
    %796 = vmatprep.subr.mxu0 0.0
    %797 = vmatpush1.msra.mxu0 0.0
    %798 = vmatprep.subr.mxu0 0.0
    %799 = vmatpush1.msra.mxu0 0.0
    %800 = vmatprep.subr.mxu0 0.0
    %801 = vmatpush1.msra.mxu0 0.0
    %802 = vmatprep.subr.mxu0 0.0
    %803 = vmatpush1.msra.mxu0 0.0
    %804 = vmatprep.subr.mxu0 0.0
    %805 = vmatpush1.msra.mxu0 0.0
    %806 = vmatprep.subr.mxu0 0.0
    %807 = vmatpush1.msra.mxu0 0.0
    %808 = vmatprep.subr.mxu0 0.0
    %809 = vmatpush1.msra.mxu0 0.0
    %810 = vmatprep.subr.mxu0 0.0
    %811 = vmatpush1.msra.mxu0 0.0
    %812 = vmatprep.subr.mxu0 0.0
    %813 = vmatpush1.msra.mxu0 0.0
    %814 = vmatprep.subr.mxu0 0.0
    %815 = vmatpush1.msra.mxu0 0.0
    %816 = vmatprep.subr.mxu0 0.0
    %817 = vmatpush1.msra.mxu0 0.0
    %818 = vmatprep.subr.mxu0 0.0
    %819 = vmatpush1.msra.mxu0 0.0
    %820 = vmatprep.subr.mxu0 0.0
    %821 = vmatpush1.msra.mxu0 0.0
    %822 = vmatprep.subr.mxu0 0.0
    %823 = vmatpush1.msra.mxu0 0.0
    %824 = vmatprep.subr.mxu0 0.0
    %825 = vmatpush1.msra.mxu0 0.0
    %826 = vmatprep.subr.mxu0 0.0
    %827 = vmatpush1.msra.mxu0 0.0
    %828 = vmatprep.subr.mxu0 0.0
    %829 = vmatpush1.msra.mxu0 0.0
    %830 = vmatprep.subr.mxu0 0.0
    %831 = vmatpush1.msra.mxu0 0.0
    %832 = vmatprep.subr.mxu0 0.0
    %833 = vmatpush1.msra.mxu0 0.0
    %834 = vmatprep.subr.mxu0 0.0
    %835 = vmatpush1.msra.mxu0 0.0
    %836 = vmatprep.subr.mxu0 0.0
    %837 = vmatpush1.msra.mxu0 0.0
    %838 = vmatprep.subr.mxu0 0.0
    %839 = vmatpush1.msra.mxu0 0.0
    %840 = vmatprep.subr.mxu0 0.0
    %841 = vmatpush1.msra.mxu0 0.0
    %842 = vmatprep.subr.mxu0 0.0
    %843 = vmatpush1.msra.mxu0 0.0
    %844 = vmatprep.mubr.f32.mxu0 0.0
    %845 = vmatmul.mubr.f32.gmra.mrb[0].mxu0 %v695
    %v846 = vpop.f32.mrb[0].mxu0
    %v847 = vadd.f32 0.0, %v846
    %v848 = vpop.f32.mrb[0].mxu0
    %v849 = vadd.f32 0.0, %v848
    %850 = vdwg.mxu0
    %v851 = vsel %vm267, %v776, 0.0
    %v852 = vsel %vm267, %v778, 0.0
    %v853 = vadd.f32 %v851, %v852
    %v854 = vsel %vm267, %v847, 0.0
    %v855 = vadd.f32 %v853, %v854
    %v856 = vsel %vm267, %v849, 0.0
    %v857 = vadd.f32 %v855, %v856
    %858 = vadd.xlane.f32.xlu0 %v857
    %v859 = vpop.xlane.xlu0 %858
    %v860 = vmul.f32 %v776, %v776
    %v861 = vmul.f32 %v778, %v778
    %v862 = vmul.f32 %v847, %v847
    %v863 = vmul.f32 %v849, %v849
    %v864 = vsel %vm267, %v860, 0.0
    %v865 = vsel %vm267, %v861, 0.0
    %v866 = vadd.f32 %v864, %v865
    %v867 = vsel %vm267, %v862, 0.0
    %v868 = vadd.f32 %v866, %v867
    %v869 = vsel %vm267, %v863, 0.0
    %v870 = vadd.f32 %v868, %v869
    %871 = vadd.xlane.f32.xlu0 %v870
    %v872 = vpop.xlane.xlu0 %871
    %v873 = vmul.f32 %v859, 0.001953125
    %v874 = vmul.f32 %v872, 0.001953125
    %v875 = vmul.f32 %v873, %v873
    %v876 = vsub.f32 %v874, %v875
    %v877 = vmax.f32 %v876, 0.0
    %v878 = vadd.f32 %v877, 1e-05
    %v879 = vrsqrt.pop %v878
    %v880 = vmul.f32 %v86, %v879
    %v881 = vmul.f32 %v873, %v880
    %883 = vrot.lane.b32.xlu0 %v881, 1
    %v884 = vpop.permute.xlu0 %883
    %v886 = vsub.f32 %v86, %v884
    %888 = vset.pattern.permute.xlu0 2
    %889 = vperm.xlu0 %888, %v880
    %v890 = vpop.permute.xlu0 %889
    %v892 = vmul.f32 %v776, %v890
    %v893 = vmul.f32 %v778, %v890
    %v894 = vmul.f32 %v847, %v890
    %v895 = vmul.f32 %v849, %v890
    %897 = vset.pattern.permute.xlu0 3
    %898 = vperm.xlu0 %897, %v886
    %v899 = vpop.permute.xlu0 %898
    %v901 = vadd.f32 %v892, %v899
    %v902 = vadd.f32 %v893, %v899
    %v903 = vadd.f32 %v894, %v899
    %v904 = vadd.f32 %v895, %v899
    %v905 = vadd.f32 %v76, %v901
    %v906 = vadd.f32 %v80, %v902
    %v907 = vadd.f32 %v78, %v903
    %v908 = vadd.f32 %v83, %v904
    %v911 = vcombine.low %v905, %v906
    %913 = vst [vmem:[#allocation7] sm:$0xff] %v911
    %v916 = vcombine.low %v907, %v908
    %s918 = scalar_lea.vmem [#allocation7], 8
    %919 = vst [vmem:[%s918] sm:$0xff] %v916
    // Predicated region
    $region22: #{tpu_custom_call.1} parent=1 // pred_check
      _
    $region23: #{tpu_custom_call.1} parent=1 // pred_check_branch
      %921 = sbr.rel (0) target = $region25
    $region24: #{tpu_custom_call.1} parent=1 // pred_region
      %s923 = ssub.s32 256, 256
      %924 = vsyncadd [#allocation4], %s923
      %s925 = sshll.u32 [#allocation7], 4
      %s926 = int_to_ptr.vmem [resolvable:$true] %s925
      %931 = dma.vmem_to_hbm [thread:$0]  %s926, 256, %s3, [#allocation4], 128, 128, 8
    $region25: #{tpu_custom_call.1} parent=1 // pred_fallthru
      _
    // Predicated region
    $region26: #{tpu_custom_call.1} parent=1 // pred_check
      _
    $region27: #{tpu_custom_call.1} parent=1 // pred_check_branch
      %933 = sbr.rel (0) target = $region29
    $region28: #{tpu_custom_call.1} parent=1 // pred_region
      %934 = dma.done [#allocation4], 256
    $region29: #{tpu_custom_call.1} parent=1 // pred_fallthru
      _
    %935 = vsyncpa [#allocation3], 1
    %936 = vsyncpa [#allocation6], 1
    %937 = vsyncpa [#allocation4], 1

</llo_original>
